<compile_context>
chip_gen: v7x
topology: tpu7x:2x2x1
jax: 0.10.0
libtpu: 0.0.40
codegen_flags: <defaults>
</compile_context>

<pallas_src>
import functools
import math

import jax
import jax.numpy as jnp
from jax.experimental import pallas as pl
from jax.experimental.pallas import tpu as pltpu


_SUBLANE = 16   # safe sublane multiple for bf16/f32 token tiles
_LANE = 128


def _llama_hidden_dim(dim: int, hidden_dim: int, multiple_of: int) -> int:
    hidden_dim = int(2 * hidden_dim / 3)
    return multiple_of * ((hidden_dim + multiple_of - 1) // multiple_of)


def _round_up(a: int, b: int) -> int:
    return (a + b - 1) // b * b


def _physical_vmem_bytes() -> int:
    try:
        return int(pltpu.get_tpu_info().vmem_capacity_bytes)
    except Exception:
        return 128 * 1024 * 1024   # v5e/v6e default; v7x query handled above


def _pick_tn(hidden: int, target: int) -> int:
    """Largest hidden tile <= target that is a multiple of 128 and divides hidden."""
    target = max(int(target), _LANE)
    if hidden <= target:
        return hidden
    start = target - (target % _LANE)
    for cand in range(start, 0, -_LANE):
        if hidden % cand == 0:
            return cand
    return hidden  # unreachable when hidden is a multiple of 128


def _working_set_bytes(tm, tn, dim, compute_dtype, out_dtype, use_acc) -> int:
    """Double-buffered VMEM working set for one grid step."""
    cb = jnp.dtype(compute_dtype).itemsize
    ob = jnp.dtype(out_dtype).itemsize
    x_b = 2 * tm * dim * cb               # x tile (double buffered)
    w13_b = 2 * dim * 2 * tn * cb         # fused [W1|W3] tile
    w2_b = 2 * tn * dim * cb              # down-projection tile
    o_b = 2 * tm * dim * ob               # output tile
    acc_b = tm * dim * 4 if use_acc else 0
    tmp_b = tm * 2 * tn * 4 + tm * tn * cb   # h13 (f32) + gated h intermediates
    return x_b + w13_b + w2_b + o_b + acc_b + tmp_b


def prepare_ffn_weights(w1, w2, w3, *, tn, compute_dtype=jnp.bfloat16):
    """One-time weight prep — call at parameter-init time, NOT per forward call.

    w1, w3: (hidden, dim); w2: (dim, hidden)   (PyTorch nn.Linear layout)
    The hidden axis is zero-padded to a multiple of tn (exact: padded hidden
    units produce silu(0)*0 = 0 and contribute nothing to the down projection).

    Returns:
      w13: (nh, dim, 2*tn)  — each hidden tile's fused [W1_j | W3_j] slab is
                              contiguous in HBM (efficient DMA).
      w2t: (hidden_pad, dim) — each (tn, dim) tile is contiguous rows.
    """
    hidden, dim = w1.shape
    hidden_pad = _round_up(hidden, tn)
    pad = hidden_pad - hidden
    w1 = jnp.asarray(w1, compute_dtype)
    w2 = jnp.asarray(w2, compute_dtype)
    w3 = jnp.asarray(w3, compute_dtype)
    if pad:
        w1 = jnp.pad(w1, ((0, pad), (0, 0)))
        w3 = jnp.pad(w3, ((0, pad), (0, 0)))
        w2 = jnp.pad(w2, ((0, 0), (0, pad)))
    nh = hidden_pad // tn
    w1t = w1.T.reshape(dim, nh, tn)
    w3t = w3.T.reshape(dim, nh, tn)
    w13 = jnp.concatenate([w1t, w3t], axis=2).transpose(1, 0, 2)  # (nh, dim, 2*tn)
    w2t = w2.T                                                    # (hidden_pad, dim)
    return w13, w2t


def _ffn_kernel(x_ref, w13_ref, w2_ref, o_ref, *scratch, tn, compute_dtype):
    # x_ref:   (tm, dim)       token tile, already in compute_dtype
    # w13_ref: (1, dim, 2*tn)  fused [W1 | W3] hidden-tile slab (pre-transposed)
    # w2_ref:  (tn, dim)       down-projection hidden tile (pre-transposed)
    # o_ref:   (tm, dim)
    # scratch: optional (tm, dim) f32 accumulator; when the output itself is f32
    #          we accumulate straight into o_ref and skip the scratch.
    acc_ref = scratch[0] if scratch else o_ref
    j = pl.program_id(1)

    @pl.when(j == 0)
    def _():
        acc_ref[...] = jnp.zeros_like(acc_ref)

    # One fused MXU matmul for both the gate (w1) and up (w3) projections.
    h13 = jnp.dot(x_ref[...], w13_ref[0], preferred_element_type=jnp.float32)
    h1 = h13[:, :tn]
    h3 = h13[:, tn:]
    h = (h1 * jax.nn.sigmoid(h1)) * h3          # SiLU gate in f32 (sigmoid -> EUP)
    acc_ref[...] += jnp.dot(h.astype(compute_dtype), w2_ref[...],
                            preferred_element_type=jnp.float32)

    if scratch:
        @pl.when(j == pl.num_programs(1) - 1)
        def _():
            o_ref[...] = acc_ref[...].astype(o_ref.dtype)


def feed_forward_prepared(x, w13, w2t, *, tm=512, compute_dtype=jnp.bfloat16,
                          out_dtype=None, vmem_limit_bytes=None):
    """x: (..., dim). w13/w2t from prepare_ffn_weights (pre-transposed/fused/cast)."""
    orig_shape = x.shape
    dim = orig_shape[-1]
    nh, dim_w, two_tn = w13.shape
    assert dim_w == dim and two_tn % 2 == 0
    tn = two_tn // 2
    hidden = w2t.shape[0]
    assert hidden == nh * tn and w2t.shape[1] == dim

    out_dtype = jnp.dtype(compute_dtype if out_dtype is None else out_dtype)
    use_acc = out_dtype != jnp.dtype(jnp.float32)

    # Cast x ONCE in HBM (halves x DMA/VMEM; removes per-step in-kernel casts).
    x2d = x.reshape(-1, dim).astype(compute_dtype)
    m = x2d.shape[0]

    vmem_budget = int(0.9 * _physical_vmem_bytes())

    # Token tile: clamp for small calls; keep >= 2 token blocks when possible so
    # both v7x TensorCores get work along the "parallel" axis.
    tm_eff = max(_SUBLANE, min(tm, _round_up(m, _SUBLANE)))
    if m > _SUBLANE and _round_up(m, tm_eff) // tm_eff < 2:
        tm_eff = max(_SUBLANE, _round_up(-(-m // 2), _SUBLANE))
    # TODO(synk): for decode-sized m (single token tile) on v7x, split the hidden
    # axis across TensorCores (core-parallel partial sums) instead of the token axis.

    # Shrink the token tile if the working set would not fit VMEM (v7x: 64 MiB/TC).
    while (_working_set_bytes(tm_eff, tn, dim, compute_dtype, out_dtype, use_acc)
           > vmem_budget and tm_eff > _SUBLANE):
        tm_eff = max(_SUBLANE, _round_up(tm_eff // 2, _SUBLANE))

    m_pad = _round_up(m, tm_eff)
    if m_pad != m:
        x2d = jnp.pad(x2d, ((0, m_pad - m), (0, 0)))
    grid_i = m_pad // tm_eff
    grid = (grid_i, nh)   # hidden (reduction) axis last

    if vmem_limit_bytes is None:
        need = _working_set_bytes(tm_eff, tn, dim, compute_dtype, out_dtype, use_acc)
        vmem_limit_bytes = min(max(need + (8 << 20), 32 << 20), vmem_budget)

    cb = jnp.dtype(compute_dtype).itemsize
    cost = pl.CostEstimate(
        flops=2 * m_pad * dim * hidden * 3,
        transcendentals=m_pad * hidden,
        # x read + out written once; weights re-streamed once per token tile.
        bytes_accessed=(m_pad * dim * (cb + out_dtype.itemsize)
                        + grid_i * 3 * dim * hidden * cb),
    )

    kernel = functools.partial(_ffn_kernel, tn=tn, compute_dtype=compute_dtype)
    scratch_shapes = [pltpu.VMEM((tm_eff, dim), jnp.float32)] if use_acc else []

    out = pl.pallas_call(
        kernel,
        out_shape=jax.ShapeDtypeStruct((m_pad, dim), out_dtype),
        grid_spec=pltpu.PrefetchScalarGridSpec(
            num_scalar_prefetch=0,
            grid=grid,
            in_specs=[
                pl.BlockSpec((tm_eff, dim), lambda i, j: (i, 0)),
                pl.BlockSpec((1, dim, 2 * tn), lambda i, j: (j, 0, 0)),
                pl.BlockSpec((tn, dim), lambda i, j: (j, 0)),
            ],
            out_specs=pl.BlockSpec((tm_eff, dim), lambda i, j: (i, 0)),
            scratch_shapes=scratch_shapes,
        ),
        compiler_params=pltpu.CompilerParams(
            dimension_semantics=("parallel", "arbitrary"),
            vmem_limit_bytes=int(vmem_limit_bytes),
        ),
        cost_estimate=cost,
    )(x2d, w13, w2t)

    if m_pad != m:
        out = out[:m]
    return out.reshape(orig_shape)


def feed_forward(x, w1, w2, w3, *, tm=512, tn_target=512,
                 compute_dtype=jnp.bfloat16, out_dtype=None):
    """Convenience wrapper taking PyTorch-layout weights.

    NOTE: in production call prepare_ffn_weights ONCE at init and use
    feed_forward_prepared directly, so the transpose/fuse/cast is not paid per call.
    """
    hidden, dim = w1.shape
    hidden_pad = _round_up(hidden, _LANE)
    out_dt = jnp.dtype(compute_dtype if out_dtype is None else out_dtype)
    use_acc = out_dt != jnp.dtype(jnp.float32)
    vmem_budget = int(0.9 * _physical_vmem_bytes())

    # Pick the hidden tile with the VMEM budget in mind (tm is the worst case).
    tn = _pick_tn(hidden_pad, tn_target)
    while (_working_set_bytes(tm, tn, dim, compute_dtype, out_dt, use_acc) > vmem_budget
           and tn > _LANE):
        tn = _pick_tn(hidden_pad, tn // 2)

    w13, w2t = prepare_ffn_weights(w1, w2, w3, tn=tn, compute_dtype=compute_dtype)
    return feed_forward_prepared(x, w13, w2t, tm=tm, compute_dtype=compute_dtype,
                                 out_dtype=out_dtype)


if __name__ == "__main__":
    # Module config (small, lane-aligned): dim=128, hidden_dim arg=512, multiple_of=128
    dim = 128
    hidden_arg = 512
    multiple_of = 128
    hidden = _llama_hidden_dim(dim, hidden_arg, multiple_of)  # -> 384

    batch, seq = 2, 8
    key = jax.random.PRNGKey(0)
    kx, k1, k2, k3 = jax.random.split(key, 4)

    x = jax.random.normal(kx, (batch, seq, dim), dtype=jnp.float32)

    # Deterministic init matching nn.Linear weight shapes (out_features, in_features).
    bound1 = 1.0 / math.sqrt(dim)
    bound2 = 1.0 / math.sqrt(hidden)
    w1 = jax.random.uniform(k1, (hidden, dim), jnp.float32, -bound1, bound1)
    w2 = jax.random.uniform(k2, (dim, hidden), jnp.float32, -bound2, bound2)
    w3 = jax.random.uniform(k3, (hidden, dim), jnp.float32, -bound1, bound1)

    # Pure-JAX reference of the SwiGLU FFN semantics.
    h1 = x @ w1.T
    ref = (h1 * jax.nn.sigmoid(h1) * (x @ w3.T)) @ w2.T

    # 1) f32 compute, f32 output, single hidden tile: exact check (no-scratch path).
    out_f32 = jax.block_until_ready(
        feed_forward(x, w1, w2, w3, compute_dtype=jnp.float32, out_dtype=jnp.float32))
    assert out_f32.shape == x.shape
    assert jnp.allclose(out_f32, ref, atol=1e-3, rtol=1e-3), \
        float(jnp.max(jnp.abs(out_f32 - ref)))

    # 2) f32 compute, hidden tiled (tn=128 -> nh=3): exercises the reduction axis.
    out_f32_t = jax.block_until_ready(
        feed_forward(x, w1, w2, w3, compute_dtype=jnp.float32, out_dtype=jnp.float32,
                     tn_target=128))
    assert jnp.allclose(out_f32_t, ref, atol=1e-3, rtol=1e-3), \
        float(jnp.max(jnp.abs(out_f32_t - ref)))

    # 3) bf16 MXU path with f32 accumulation, bf16 output (production default).
    out_bf16 = jax.block_until_ready(
        feed_forward(x, w1, w2, w3, compute_dtype=jnp.bfloat16))
    assert out_bf16.dtype == jnp.bfloat16 and out_bf16.shape == x.shape
    assert jnp.allclose(out_bf16.astype(jnp.float32), ref, atol=5e-2, rtol=5e-2), \
        float(jnp.max(jnp.abs(out_bf16.astype(jnp.float32) - ref)))

    # 4) ragged token count (m=24 -> zero-padded, 2 token tiles) with hidden tiling.
    x_rag = jax.random.normal(kx, (3, 8, dim), dtype=jnp.float32)
    h1r = x_rag @ w1.T
    ref_r = (h1r * jax.nn.sigmoid(h1r) * (x_rag @ w3.T)) @ w2.T
    out_r = jax.block_until_ready(
        feed_forward(x_rag, w1, w2, w3, compute_dtype=jnp.bfloat16, tn_target=128))
    assert out_r.shape == x_rag.shape
    assert jnp.allclose(out_r.astype(jnp.float32), ref_r, atol=5e-2, rtol=5e-2), \
        float(jnp.max(jnp.abs(out_r.astype(jnp.float32) - ref_r)))

    print("KERNEL_OK")
</pallas_src>

<mosaic_0001>
module attributes {stable_mosaic.version = 11 : i64} {
  func.func @_ffn_kernel(%arg0: i32, %arg1: i32, %arg2: memref<16x128xf32, #tpu.memory_space<vmem>>, %arg3: memref<1x128x768xf32, #tpu.memory_space<vmem>>, %arg4: memref<384x128xf32, #tpu.memory_space<vmem>>, %arg5: memref<16x128xf32, #tpu.memory_space<vmem>>) attributes {dimension_semantics = [#tpu.dimension_semantics<parallel>, #tpu.dimension_semantics<arbitrary>], iteration_bounds = array<i64: 1, 1>, scalar_prefetch = 0 : i64, scratch_operands = 0 : i64, tpu.core_type = #tpu.core_type<tc>, window_params = [{transform_indices = @transform_0, window_bounds = array<i64: 16, 128>}, {transform_indices = @transform_1, window_bounds = array<i64: 1, 128, 768>}, {transform_indices = @transform_2, window_bounds = array<i64: 384, 128>}, {transform_indices = @transform_3, window_bounds = array<i64: 16, 128>}]} {
    %c0_i32 = arith.constant 0 : i32
    %0 = arith.cmpi eq, %arg1, %c0_i32 : i32
    %1 = arith.extui %0 : i1 to i32
    %c0_i32_0 = arith.constant 0 : i32
    %2 = arith.cmpi ne, %1, %c0_i32_0 : i32
    scf.if %2 {
      %cst_13 = arith.constant 0.000000e+00 : f32
      %21 = vector.broadcast %cst_13 : f32 to vector<16x128xf32>
      %c0_14 = arith.constant 0 : index
      %c0_15 = arith.constant 0 : index
      %22 = vector.load %arg5[%c0_14, %c0_15] : memref<16x128xf32, #tpu.memory_space<vmem>>, vector<16x128xf32>
      tpu.vector_store %arg5[%c0_14, %c0_15], %21 {strides = array<i32>} : memref<16x128xf32, #tpu.memory_space<vmem>>, vector<16x128xf32>,
    } else {
    }
    %c0 = arith.constant 0 : index
    %c0_1 = arith.constant 0 : index
    %3 = vector.load %arg2[%c0, %c0_1] : memref<16x128xf32, #tpu.memory_space<vmem>>, vector<16x128xf32>
    %c0_2 = arith.constant 0 : index
    %c0_3 = arith.constant 0 : index
    %c0_4 = arith.constant 0 : index
    %4 = vector.load %arg3[%c0_2, %c0_3, %c0_4] : memref<1x128x768xf32, #tpu.memory_space<vmem>>, vector<1x128x768xf32>
    %5 = vector.shape_cast %4 : vector<1x128x768xf32> to vector<128x768xf32>
    %cst = arith.constant dense<0.000000e+00> : vector<16x768xf32>
    %6 = tpu.matmul %3, %5, %cst {dimension_numbers = #tpu.dot_dimension_numbers<[1], [0], [0], [1], [0, 0, 1, 1], [], []>} : vector<16x128xf32>, vector<128x768xf32>, vector<16x768xf32> -> vector<16x768xf32>
    %7 = vector.extract_strided_slice %6 {offsets = [0, 0], sizes = [16, 384], strides = [1, 1]} : vector<16x768xf32> to vector<16x384xf32>
    %8 = vector.extract_strided_slice %6 {offsets = [0, 384], sizes = [16, 384], strides = [1, 1]} : vector<16x768xf32> to vector<16x384xf32>
    %9 = arith.negf %7 : vector<16x384xf32>
    %10 = math.exp %9 : vector<16x384xf32>
    %cst_5 = arith.constant 1.000000e+00 : f32
    %11 = vector.broadcast %cst_5 : f32 to vector<16x384xf32>
    %12 = arith.addf %11, %10 : vector<16x384xf32>
    %13 = arith.divf %11, %12 : vector<16x384xf32>
    %14 = arith.mulf %7, %13 : vector<16x384xf32>
    %15 = arith.mulf %14, %8 : vector<16x384xf32>
    %c0_6 = arith.constant 0 : index
    %c0_7 = arith.constant 0 : index
    %16 = vector.load %arg5[%c0_6, %c0_7] : memref<16x128xf32, #tpu.memory_space<vmem>>, vector<16x128xf32>
    %c0_8 = arith.constant 0 : index
    %c0_9 = arith.constant 0 : index
    %17 = vector.load %arg4[%c0_8, %c0_9] : memref<384x128xf32, #tpu.memory_space<vmem>>, vector<384x128xf32>
    %cst_10 = arith.constant dense<0.000000e+00> : vector<16x128xf32>
    %18 = tpu.matmul %15, %17, %cst_10 {dimension_numbers = #tpu.dot_dimension_numbers<[1], [0], [0], [1], [0, 0, 1, 1], [], []>} : vector<16x384xf32>, vector<384x128xf32>, vector<16x128xf32> -> vector<16x128xf32>
    %19 = arith.addf %16, %18 : vector<16x128xf32>
    %c0_11 = arith.constant 0 : index
    %c0_12 = arith.constant 0 : index
    %20 = vector.load %arg5[%c0_11, %c0_12] : memref<16x128xf32, #tpu.memory_space<vmem>>, vector<16x128xf32>
    tpu.vector_store %arg5[%c0_11, %c0_12], %19 {strides = array<i32>} : memref<16x128xf32, #tpu.memory_space<vmem>>, vector<16x128xf32>,
    return
  }
  func.func @transform_0(%arg0: i32, %arg1: i32) -> (i32, i32) {
    %c0_i32 = arith.constant 0 : i32
    %c0_i32_0 = arith.constant 0 : i32
    return %arg0, %c0_i32 : i32, i32
  }
  func.func @transform_1(%arg0: i32, %arg1: i32) -> (i32, i32, i32) {
    %c0_i32 = arith.constant 0 : i32
    %c0_i32_0 = arith.constant 0 : i32
    %c0_i32_1 = arith.constant 0 : i32
    return %arg1, %c0_i32, %c0_i32_0 : i32, i32, i32
  }
  func.func @transform_2(%arg0: i32, %arg1: i32) -> (i32, i32) {
    %c0_i32 = arith.constant 0 : i32
    %c0_i32_0 = arith.constant 0 : i32
    return %arg1, %c0_i32 : i32, i32
  }
  func.func @transform_3(%arg0: i32, %arg1: i32) -> (i32, i32) {
    %c0_i32 = arith.constant 0 : i32
    %c0_i32_0 = arith.constant 0 : i32
    return %arg0, %c0_i32 : i32, i32
  }
}

</mosaic_0001>

<llo_original>
// kernel: tpu_custom_call.1
$region0: #{tpu_custom_call.1}
  #allocation0 [shape = 'u32[]', space=smem, size = 0x4, offset = 0x4, fixed_abs, tag = 'smem constant byte address 0x4 - core index']
  #allocation1 [shape = 'u32[144,128]{1,0:T(1,128)}', space=vmem, size = 0x12000, scoped, tag = 'internal scratch']
  %s0 = inlined_call_operand.hbm [shape: f32[16,128], index: 0, kind: input, shape index: {}]
  %s1 = inlined_call_operand.hbm [shape: f32[1,128,768], index: 1, kind: input, shape index: {}]
  %s2 = inlined_call_operand.hbm [shape: f32[384,128], index: 2, kind: input, shape index: {}]
  %s3 = inlined_call_operand.hbm [shape: f32[16,128], index: 3, kind: output, shape index: {}]
  %s4 = sld [smem:[#allocation0]]
  $region38: #{tpu_custom_call.1} parent=0
    _
  %s6 = ssub.s32 1, %s4
  %s7 = scalar_select 0, %s6, %s4
  $region1: #{tpu_custom_call.1} parent=0
    #allocation2 [shape = 'u8[8192]{0}', space=vmem, size = 0x2000, scoped, tag = 'input window, operand 0, single buffered']
    #allocation3 [shape = 's32[1]{0}', space=sflag, size = 0x4, scoped, tag = 'scoped memory for tpu_custom_call.1']
    #allocation4 [shape = 's32[1]{0}', space=sflag, size = 0x4, scoped, tag = 'scoped memory for tpu_custom_call.1']
    #allocation5 [shape = 'u8[393216]{0}', space=vmem, size = 0x60000, scoped, tag = 'input window, operand 1, single buffered']
    #allocation6 [shape = 's32[1]{0}', space=sflag, size = 0x4, scoped, tag = 'scoped memory for tpu_custom_call.1']
    #allocation7 [shape = 'u8[196608]{0}', space=vmem, size = 0x30000, scoped, tag = 'input window, operand 2, single buffered']
    #allocation8 [shape = 'u8[8192]{0}', space=vmem, size = 0x2000, scoped, tag = 'output window, operand 0, single buffered']
    %8 = vsyncpa [#allocation3], 0
    %9 = vsyncpa [#allocation6], 0
    %10 = vsyncpa [#allocation4], 0
    // Predicated region
    $region2: #{tpu_custom_call.1} parent=1 // pred_check
      _
    $region3: #{tpu_custom_call.1} parent=1 // pred_check_branch
      %12 = sbr.rel (0) target = $region5
    $region4: #{tpu_custom_call.1} parent=1 // pred_region
      %s14 = ssub.s32 256, 256
      %15 = vsyncadd [#allocation3], %s14
      %s16 = sshll.u32 [#allocation2], 4
      %s17 = int_to_ptr.vmem [resolvable:$true] %s16
      %22 = dma.hbm_to_vmem [thread:$0]  %s0, 256, %s17, [#allocation3], 128, 128, 8
    $region5: #{tpu_custom_call.1} parent=1 // pred_fallthru
      _
    // Predicated region
    $region6: #{tpu_custom_call.1} parent=1 // pred_check
      _
    $region7: #{tpu_custom_call.1} parent=1 // pred_check_branch
      %24 = sbr.rel (0) target = $region9
    $region8: #{tpu_custom_call.1} parent=1 // pred_region
      %s26 = ssub.s32 12288, 12288
      %27 = vsyncadd [#allocation6], %s26
      %s28 = sshll.u32 [#allocation5], 4
      %s29 = int_to_ptr.vmem [resolvable:$true] %s28
      %34 = dma.hbm_to_vmem [thread:$0]  %s1, 12288, %s29, [#allocation6], 768, 768, 48
    $region9: #{tpu_custom_call.1} parent=1 // pred_fallthru
      _
    // Predicated region
    $region10: #{tpu_custom_call.1} parent=1 // pred_check
      _
    $region11: #{tpu_custom_call.1} parent=1 // pred_check_branch
      %36 = sbr.rel (0) target = $region13
    $region12: #{tpu_custom_call.1} parent=1 // pred_region
      %s38 = ssub.s32 6144, 6144
      %39 = vsyncadd [#allocation6], %s38
      %s40 = sshll.u32 [#allocation7], 4
      %s41 = int_to_ptr.vmem [resolvable:$true] %s40
      %46 = dma.hbm_to_vmem [thread:$0]  %s2, 6144, %s41, [#allocation6], 128, 128, 8
    $region13: #{tpu_custom_call.1} parent=1 // pred_fallthru
      _
    // Predicated region
    $region14: #{tpu_custom_call.1} parent=1 // pred_check
      _
    $region15: #{tpu_custom_call.1} parent=1 // pred_check_branch
      %48 = sbr.rel (0) target = $region17
    $region16: #{tpu_custom_call.1} parent=1 // pred_region
      %49 = dma.done [#allocation3], 256
    $region17: #{tpu_custom_call.1} parent=1 // pred_fallthru
      _
    // Predicated region
    $region18: #{tpu_custom_call.1} parent=1 // pred_check
      _
    $region19: #{tpu_custom_call.1} parent=1 // pred_check_branch
      %51 = sbr.rel (0) target = $region21
    $region20: #{tpu_custom_call.1} parent=1 // pred_region
      %52 = dma.done [#allocation6], 12288
    $region21: #{tpu_custom_call.1} parent=1 // pred_fallthru
      _
    // Predicated region
    $region22: #{tpu_custom_call.1} parent=1 // pred_check
      _
    $region23: #{tpu_custom_call.1} parent=1 // pred_check_branch
      %54 = sbr.rel (0) target = $region25
    $region24: #{tpu_custom_call.1} parent=1 // pred_region
      %55 = dma.done [#allocation6], 6144
    $region25: #{tpu_custom_call.1} parent=1 // pred_fallthru
      _
    %p56 = scmp.eq.s32.totalorder 0, 0
    // Predicated region
    $region26: #{tpu_custom_call.1} parent=1 // pred_check
      %p57 = pneg %p56
    $region27: #{tpu_custom_call.1} parent=1 // pred_check_branch
      %59 = sbr.rel (%p57) target = $region29
    $region28: #{tpu_custom_call.1} parent=1 // pred_region
      %60 = vst [vmem:[#allocation8] sm:$0xff] 0.0
      %61 = vst [vmem:[#allocation8 + $0x8] sm:$0xff] 0.0
    $region29: #{tpu_custom_call.1} parent=1 // pred_fallthru
      _
    %v62 = vld [vmem:[#allocation2] sm:$0xff]
    %v63 = vld [vmem:[#allocation2 + $0x8] sm:$0xff]
    %v64 = vld [vmem:[#allocation5] sm:$0xff]
    %v65 = vld [vmem:[#allocation5 + $0x8] sm:$0xff]
    %v66 = vld [vmem:[#allocation5 + $0x10] sm:$0xff]
    %v67 = vld [vmem:[#allocation5 + $0x18] sm:$0xff]
    %v68 = vld [vmem:[#allocation5 + $0x20] sm:$0xff]
    %v69 = vld [vmem:[#allocation5 + $0x28] sm:$0xff]
    %v70 = vld [vmem:[#allocation5 + $0x30] sm:$0xff]
    %v71 = vld [vmem:[#allocation5 + $0x38] sm:$0xff]
    %v72 = vld [vmem:[#allocation5 + $0x40] sm:$0xff]
    %v73 = vld [vmem:[#allocation5 + $0x48] sm:$0xff]
    %v74 = vld [vmem:[#allocation5 + $0x50] sm:$0xff]
    %v75 = vld [vmem:[#allocation5 + $0x58] sm:$0xff]
    %v76 = vld [vmem:[#allocation5 + $0x60] sm:$0xff]
    %v77 = vld [vmem:[#allocation5 + $0x68] sm:$0xff]
    %v78 = vld [vmem:[#allocation5 + $0x70] sm:$0xff]
    %v79 = vld [vmem:[#allocation5 + $0x78] sm:$0xff]
    %v80 = vld [vmem:[#allocation5 + $0x80] sm:$0xff]
    %v81 = vld [vmem:[#allocation5 + $0x88] sm:$0xff]
    %v82 = vld [vmem:[#allocation5 + $0x90] sm:$0xff]
    %v83 = vld [vmem:[#allocation5 + $0x98] sm:$0xff]
    %v84 = vld [vmem:[#allocation5 + $0xa0] sm:$0xff]
    %v85 = vld [vmem:[#allocation5 + $0xa8] sm:$0xff]
    %v86 = vld [vmem:[#allocation5 + $0xb0] sm:$0xff]
    %v87 = vld [vmem:[#allocation5 + $0xb8] sm:$0xff]
    %v88 = vld [vmem:[#allocation5 + $0xc0] sm:$0xff]
    %v89 = vld [vmem:[#allocation5 + $0xc8] sm:$0xff]
    %v90 = vld [vmem:[#allocation5 + $0xd0] sm:$0xff]
    %v91 = vld [vmem:[#allocation5 + $0xd8] sm:$0xff]
    %v92 = vld [vmem:[#allocation5 + $0xe0] sm:$0xff]
    %v93 = vld [vmem:[#allocation5 + $0xe8] sm:$0xff]
    %v94 = vld [vmem:[#allocation5 + $0xf0] sm:$0xff]
    %v95 = vld [vmem:[#allocation5 + $0xf8] sm:$0xff]
    %v96 = vld [vmem:[#allocation5 + $0x100] sm:$0xff]
    %v97 = vld [vmem:[#allocation5 + $0x108] sm:$0xff]
    %v98 = vld [vmem:[#allocation5 + $0x110] sm:$0xff]
    %v99 = vld [vmem:[#allocation5 + $0x118] sm:$0xff]
    %v100 = vld [vmem:[#allocation5 + $0x120] sm:$0xff]
    %v101 = vld [vmem:[#allocation5 + $0x128] sm:$0xff]
    %v102 = vld [vmem:[#allocation5 + $0x130] sm:$0xff]
    %v103 = vld [vmem:[#allocation5 + $0x138] sm:$0xff]
    %v104 = vld [vmem:[#allocation5 + $0x140] sm:$0xff]
    %v105 = vld [vmem:[#allocation5 + $0x148] sm:$0xff]
    %v106 = vld [vmem:[#allocation5 + $0x150] sm:$0xff]
    %v107 = vld [vmem:[#allocation5 + $0x158] sm:$0xff]
    %v108 = vld [vmem:[#allocation5 + $0x160] sm:$0xff]
    %v109 = vld [vmem:[#allocation5 + $0x168] sm:$0xff]
    %v110 = vld [vmem:[#allocation5 + $0x170] sm:$0xff]
    %v111 = vld [vmem:[#allocation5 + $0x178] sm:$0xff]
    %v112 = vld [vmem:[#allocation5 + $0x180] sm:$0xff]
    %v113 = vld [vmem:[#allocation5 + $0x188] sm:$0xff]
    %v114 = vld [vmem:[#allocation5 + $0x190] sm:$0xff]
    %v115 = vld [vmem:[#allocation5 + $0x198] sm:$0xff]
    %v116 = vld [vmem:[#allocation5 + $0x1a0] sm:$0xff]
    %v117 = vld [vmem:[#allocation5 + $0x1a8] sm:$0xff]
    %v118 = vld [vmem:[#allocation5 + $0x1b0] sm:$0xff]
    %v119 = vld [vmem:[#allocation5 + $0x1b8] sm:$0xff]
    %v120 = vld [vmem:[#allocation5 + $0x1c0] sm:$0xff]
    %v121 = vld [vmem:[#allocation5 + $0x1c8] sm:$0xff]
    %v122 = vld [vmem:[#allocation5 + $0x1d0] sm:$0xff]
    %v123 = vld [vmem:[#allocation5 + $0x1d8] sm:$0xff]
    %v124 = vld [vmem:[#allocation5 + $0x1e0] sm:$0xff]
    %v125 = vld [vmem:[#allocation5 + $0x1e8] sm:$0xff]
    %v126 = vld [vmem:[#allocation5 + $0x1f0] sm:$0xff]
    %v127 = vld [vmem:[#allocation5 + $0x1f8] sm:$0xff]
    %v128 = vld [vmem:[#allocation5 + $0x200] sm:$0xff]
    %v129 = vld [vmem:[#allocation5 + $0x208] sm:$0xff]
    %v130 = vld [vmem:[#allocation5 + $0x210] sm:$0xff]
    %v131 = vld [vmem:[#allocation5 + $0x218] sm:$0xff]
    %v132 = vld [vmem:[#allocation5 + $0x220] sm:$0xff]
    %v133 = vld [vmem:[#allocation5 + $0x228] sm:$0xff]
    %v134 = vld [vmem:[#allocation5 + $0x230] sm:$0xff]
    %v135 = vld [vmem:[#allocation5 + $0x238] sm:$0xff]
    %v136 = vld [vmem:[#allocation5 + $0x240] sm:$0xff]
    %v137 = vld [vmem:[#allocation5 + $0x248] sm:$0xff]
    %v138 = vld [vmem:[#allocation5 + $0x250] sm:$0xff]
    %v139 = vld [vmem:[#allocation5 + $0x258] sm:$0xff]
    %v140 = vld [vmem:[#allocation5 + $0x260] sm:$0xff]
    %v141 = vld [vmem:[#allocation5 + $0x268] sm:$0xff]
    %v142 = vld [vmem:[#allocation5 + $0x270] sm:$0xff]
    %v143 = vld [vmem:[#allocation5 + $0x278] sm:$0xff]
    %v144 = vld [vmem:[#allocation5 + $0x280] sm:$0xff]
    %v145 = vld [vmem:[#allocation5 + $0x288] sm:$0xff]
    %v146 = vld [vmem:[#allocation5 + $0x290] sm:$0xff]
    %v147 = vld [vmem:[#allocation5 + $0x298] sm:$0xff]
    %v148 = vld [vmem:[#allocation5 + $0x2a0] sm:$0xff]
    %v149 = vld [vmem:[#allocation5 + $0x2a8] sm:$0xff]
    %v150 = vld [vmem:[#allocation5 + $0x2b0] sm:$0xff]
    %v151 = vld [vmem:[#allocation5 + $0x2b8] sm:$0xff]
    %v152 = vld [vmem:[#allocation5 + $0x2c0] sm:$0xff]
    %v153 = vld [vmem:[#allocation5 + $0x2c8] sm:$0xff]
    %v154 = vld [vmem:[#allocation5 + $0x2d0] sm:$0xff]
    %v155 = vld [vmem:[#allocation5 + $0x2d8] sm:$0xff]
    %v156 = vld [vmem:[#allocation5 + $0x2e0] sm:$0xff]
    %v157 = vld [vmem:[#allocation5 + $0x2e8] sm:$0xff]
    %v158 = vld [vmem:[#allocation5 + $0x2f0] sm:$0xff]
    %v159 = vld [vmem:[#allocation5 + $0x2f8] sm:$0xff]
    %160 = vmatprep.subr.mxu0 %v65
    %161 = vmatpush1.msra.mxu0 %v64
    %162 = vmatprep.subr.mxu0 %v71
    %163 = vmatpush1.msra.mxu0 %v70
    %164 = vmatprep.subr.mxu0 %v77
    %165 = vmatpush1.msra.mxu0 %v76
    %166 = vmatprep.subr.mxu0 %v83
    %167 = vmatpush1.msra.mxu0 %v82
    %168 = vmatprep.subr.mxu0 %v89
    %169 = vmatpush1.msra.mxu0 %v88
    %170 = vmatprep.subr.mxu0 %v95
    %171 = vmatpush1.msra.mxu0 %v94
    %172 = vmatprep.subr.mxu0 %v101
    %173 = vmatpush1.msra.mxu0 %v100
    %174 = vmatprep.subr.mxu0 %v107
    %175 = vmatpush1.msra.mxu0 %v106
    %176 = vmatprep.subr.mxu0 %v113
    %177 = vmatpush1.msra.mxu0 %v112
    %178 = vmatprep.subr.mxu0 %v119
    %179 = vmatpush1.msra.mxu0 %v118
    %180 = vmatprep.subr.mxu0 %v125
    %181 = vmatpush1.msra.mxu0 %v124
    %182 = vmatprep.subr.mxu0 %v131
    %183 = vmatpush1.msra.mxu0 %v130
    %184 = vmatprep.subr.mxu0 %v137
    %185 = vmatpush1.msra.mxu0 %v136
    %186 = vmatprep.subr.mxu0 %v143
    %187 = vmatpush1.msra.mxu0 %v142
    %188 = vmatprep.subr.mxu0 %v149
    %189 = vmatpush1.msra.mxu0 %v148
    %190 = vmatprep.subr.mxu0 %v155
    %191 = vmatpush1.msra.mxu0 %v154
    %192 = vmatprep.subr.mxu0 0.0
    %193 = vmatpush1.msra.mxu0 0.0
    %194 = vmatprep.subr.mxu0 0.0
    %195 = vmatpush1.msra.mxu0 0.0
    %196 = vmatprep.subr.mxu0 0.0
    %197 = vmatpush1.msra.mxu0 0.0
    %198 = vmatprep.subr.mxu0 0.0
    %199 = vmatpush1.msra.mxu0 0.0
    %200 = vmatprep.subr.mxu0 0.0
    %201 = vmatpush1.msra.mxu0 0.0
    %202 = vmatprep.subr.mxu0 0.0
    %203 = vmatpush1.msra.mxu0 0.0
    %204 = vmatprep.subr.mxu0 0.0
    %205 = vmatpush1.msra.mxu0 0.0
    %206 = vmatprep.subr.mxu0 0.0
    %207 = vmatpush1.msra.mxu0 0.0
    %208 = vmatprep.subr.mxu0 0.0
    %209 = vmatpush1.msra.mxu0 0.0
    %210 = vmatprep.subr.mxu0 0.0
    %211 = vmatpush1.msra.mxu0 0.0
    %212 = vmatprep.subr.mxu0 0.0
    %213 = vmatpush1.msra.mxu0 0.0
    %214 = vmatprep.subr.mxu0 0.0
    %215 = vmatpush1.msra.mxu0 0.0
    %216 = vmatprep.subr.mxu0 0.0
    %217 = vmatpush1.msra.mxu0 0.0
    %218 = vmatprep.subr.mxu0 0.0
    %219 = vmatpush1.msra.mxu0 0.0
    %220 = vmatprep.subr.mxu0 0.0
    %221 = vmatpush1.msra.mxu0 0.0
    %222 = vmatprep.subr.mxu0 0.0
    %223 = vmatpush1.msra.mxu0 0.0
    %224 = vmatprep.mubr.f32.mxu0 0.0
    %225 = vmatmul.mubr.f32.gmra.mrb[0].mxu0 %v62
    %v226 = vpop.f32.mrb[0].mxu0
    %v227 = vadd.f32 0.0, %v226
    %v228 = vpop.f32.mrb[0].mxu0
    %v229 = vadd.f32 0.0, %v228
    %230 = vmatprep.mubr.f32.mxu0 0.0
    %231 = vmatmul.mubr.f32.gmra.mrb[0].mxu0 %v63
    %v232 = vpop.f32.mrb[0].mxu0
    %v233 = vadd.f32 0.0, %v232
    %v234 = vpop.f32.mrb[0].mxu0
    %v235 = vadd.f32 0.0, %v234
    %236 = vdwg.mxu0
    %237 = vmatprep.subr.mxu0 %v67
    %238 = vmatpush1.msra.mxu0 %v66
    %239 = vmatprep.subr.mxu0 %v73
    %240 = vmatpush1.msra.mxu0 %v72
    %241 = vmatprep.subr.mxu0 %v79
    %242 = vmatpush1.msra.mxu0 %v78
    %243 = vmatprep.subr.mxu0 %v85
    %244 = vmatpush1.msra.mxu0 %v84
    %245 = vmatprep.subr.mxu0 %v91
    %246 = vmatpush1.msra.mxu0 %v90
    %247 = vmatprep.subr.mxu0 %v97
    %248 = vmatpush1.msra.mxu0 %v96
    %249 = vmatprep.subr.mxu0 %v103
    %250 = vmatpush1.msra.mxu0 %v102
    %251 = vmatprep.subr.mxu0 %v109
    %252 = vmatpush1.msra.mxu0 %v108
    %253 = vmatprep.subr.mxu0 %v115
    %254 = vmatpush1.msra.mxu0 %v114
    %255 = vmatprep.subr.mxu0 %v121
    %256 = vmatpush1.msra.mxu0 %v120
    %257 = vmatprep.subr.mxu0 %v127
    %258 = vmatpush1.msra.mxu0 %v126
    %259 = vmatprep.subr.mxu0 %v133
    %260 = vmatpush1.msra.mxu0 %v132
    %261 = vmatprep.subr.mxu0 %v139
    %262 = vmatpush1.msra.mxu0 %v138
    %263 = vmatprep.subr.mxu0 %v145
    %264 = vmatpush1.msra.mxu0 %v144
    %265 = vmatprep.subr.mxu0 %v151
    %266 = vmatpush1.msra.mxu0 %v150
    %267 = vmatprep.subr.mxu0 %v157
    %268 = vmatpush1.msra.mxu0 %v156
    %269 = vmatprep.subr.mxu0 0.0
    %270 = vmatpush1.msra.mxu0 0.0
    %271 = vmatprep.subr.mxu0 0.0
    %272 = vmatpush1.msra.mxu0 0.0
    %273 = vmatprep.subr.mxu0 0.0
    %274 = vmatpush1.msra.mxu0 0.0
    %275 = vmatprep.subr.mxu0 0.0
    %276 = vmatpush1.msra.mxu0 0.0
    %277 = vmatprep.subr.mxu0 0.0
    %278 = vmatpush1.msra.mxu0 0.0
    %279 = vmatprep.subr.mxu0 0.0
    %280 = vmatpush1.msra.mxu0 0.0
    %281 = vmatprep.subr.mxu0 0.0
    %282 = vmatpush1.msra.mxu0 0.0
    %283 = vmatprep.subr.mxu0 0.0
    %284 = vmatpush1.msra.mxu0 0.0
    %285 = vmatprep.subr.mxu0 0.0
    %286 = vmatpush1.msra.mxu0 0.0
    %287 = vmatprep.subr.mxu0 0.0
    %288 = vmatpush1.msra.mxu0 0.0
    %289 = vmatprep.subr.mxu0 0.0
    %290 = vmatpush1.msra.mxu0 0.0
    %291 = vmatprep.subr.mxu0 0.0
    %292 = vmatpush1.msra.mxu0 0.0
    %293 = vmatprep.subr.mxu0 0.0
    %294 = vmatpush1.msra.mxu0 0.0
    %295 = vmatprep.subr.mxu0 0.0
    %296 = vmatpush1.msra.mxu0 0.0
    %297 = vmatprep.subr.mxu0 0.0
    %298 = vmatpush1.msra.mxu0 0.0
    %299 = vmatprep.subr.mxu0 0.0
    %300 = vmatpush1.msra.mxu0 0.0
    %301 = vmatprep.mubr.f32.mxu0 0.0
    %302 = vmatmul.mubr.f32.gmra.mrb[0].mxu0 %v62
    %v303 = vpop.f32.mrb[0].mxu0
    %v304 = vadd.f32 0.0, %v303
    %v305 = vpop.f32.mrb[0].mxu0
    %v306 = vadd.f32 0.0, %v305
    %307 = vmatprep.mubr.f32.mxu0 0.0
    %308 = vmatmul.mubr.f32.gmra.mrb[0].mxu0 %v63
    %v309 = vpop.f32.mrb[0].mxu0
    %v310 = vadd.f32 0.0, %v309
    %v311 = vpop.f32.mrb[0].mxu0
    %v312 = vadd.f32 0.0, %v311
    %313 = vdwg.mxu0
    %314 = vmatprep.subr.mxu0 %v69
    %315 = vmatpush1.msra.mxu0 %v68
    %316 = vmatprep.subr.mxu0 %v75
    %317 = vmatpush1.msra.mxu0 %v74
    %318 = vmatprep.subr.mxu0 %v81
    %319 = vmatpush1.msra.mxu0 %v80
    %320 = vmatprep.subr.mxu0 %v87
    %321 = vmatpush1.msra.mxu0 %v86
    %322 = vmatprep.subr.mxu0 %v93
    %323 = vmatpush1.msra.mxu0 %v92
    %324 = vmatprep.subr.mxu0 %v99
    %325 = vmatpush1.msra.mxu0 %v98
    %326 = vmatprep.subr.mxu0 %v105
    %327 = vmatpush1.msra.mxu0 %v104
    %328 = vmatprep.subr.mxu0 %v111
    %329 = vmatpush1.msra.mxu0 %v110
    %330 = vmatprep.subr.mxu0 %v117
    %331 = vmatpush1.msra.mxu0 %v116
    %332 = vmatprep.subr.mxu0 %v123
    %333 = vmatpush1.msra.mxu0 %v122
    %334 = vmatprep.subr.mxu0 %v129
    %335 = vmatpush1.msra.mxu0 %v128
    %336 = vmatprep.subr.mxu0 %v135
    %337 = vmatpush1.msra.mxu0 %v134
    %338 = vmatprep.subr.mxu0 %v141
    %339 = vmatpush1.msra.mxu0 %v140
    %340 = vmatprep.subr.mxu0 %v147
    %341 = vmatpush1.msra.mxu0 %v146
    %342 = vmatprep.subr.mxu0 %v153
    %343 = vmatpush1.msra.mxu0 %v152
    %344 = vmatprep.subr.mxu0 %v159
    %345 = vmatpush1.msra.mxu0 %v158
    %346 = vmatprep.subr.mxu0 0.0
    %347 = vmatpush1.msra.mxu0 0.0
    %348 = vmatprep.subr.mxu0 0.0
    %349 = vmatpush1.msra.mxu0 0.0
    %350 = vmatprep.subr.mxu0 0.0
    %351 = vmatpush1.msra.mxu0 0.0
    %352 = vmatprep.subr.mxu0 0.0
    %353 = vmatpush1.msra.mxu0 0.0
    %354 = vmatprep.subr.mxu0 0.0
    %355 = vmatpush1.msra.mxu0 0.0
    %356 = vmatprep.subr.mxu0 0.0
    %357 = vmatpush1.msra.mxu0 0.0
    %358 = vmatprep.subr.mxu0 0.0
    %359 = vmatpush1.msra.mxu0 0.0
    %360 = vmatprep.subr.mxu0 0.0
    %361 = vmatpush1.msra.mxu0 0.0
    %362 = vmatprep.subr.mxu0 0.0
    %363 = vmatpush1.msra.mxu0 0.0
    %364 = vmatprep.subr.mxu0 0.0
    %365 = vmatpush1.msra.mxu0 0.0
    %366 = vmatprep.subr.mxu0 0.0
    %367 = vmatpush1.msra.mxu0 0.0
    %368 = vmatprep.subr.mxu0 0.0
    %369 = vmatpush1.msra.mxu0 0.0
    %370 = vmatprep.subr.mxu0 0.0
    %371 = vmatpush1.msra.mxu0 0.0
    %372 = vmatprep.subr.mxu0 0.0
    %373 = vmatpush1.msra.mxu0 0.0
    %374 = vmatprep.subr.mxu0 0.0
    %375 = vmatpush1.msra.mxu0 0.0
    %376 = vmatprep.subr.mxu0 0.0
    %377 = vmatpush1.msra.mxu0 0.0
    %378 = vmatprep.mubr.f32.mxu0 0.0
    %379 = vmatmul.mubr.f32.gmra.mrb[0].mxu0 %v62
    %v380 = vpop.f32.mrb[0].mxu0
    %v381 = vadd.f32 0.0, %v380
    %v382 = vpop.f32.mrb[0].mxu0
    %v383 = vadd.f32 0.0, %v382
    %384 = vmatprep.mubr.f32.mxu0 0.0
    %385 = vmatmul.mubr.f32.gmra.mrb[0].mxu0 %v63
    %v386 = vpop.f32.mrb[0].mxu0
    %v387 = vadd.f32 0.0, %v386
    %v388 = vpop.f32.mrb[0].mxu0
    %v389 = vadd.f32 0.0, %v388
    %390 = vdwg.mxu0
    %v391 = vxor.u32 %v227, 2147483648
    %v392 = vxor.u32 %v229, 2147483648
    %v393 = vxor.u32 %v304, 2147483648
    %v394 = vxor.u32 %v233, 2147483648
    %v395 = vxor.u32 %v235, 2147483648
    %v396 = vxor.u32 %v310, 2147483648
    %v397 = vmul.f32 %v391, 1.442695
    %v398 = vpow.pop %v397
    %v399 = vmul.f32 %v392, 1.442695
    %v400 = vpow.pop %v399
    %v401 = vmul.f32 %v393, 1.442695
    %v402 = vpow.pop %v401
    %v403 = vmul.f32 %v394, 1.442695
    %v404 = vpow.pop %v403
    %v405 = vmul.f32 %v395, 1.442695
    %v406 = vpow.pop %v405
    %v407 = vmul.f32 %v396, 1.442695
    %v408 = vpow.pop %v407
    %v409 = vadd.f32 %v398, 1.0
    %v410 = vadd.f32 %v400, 1.0
    %v411 = vadd.f32 %v402, 1.0
    %v412 = vadd.f32 %v404, 1.0
    %v413 = vadd.f32 %v406, 1.0
    %v414 = vadd.f32 %v408, 1.0
    %v415 = vrcp.pop %v409
    %v416 = vmul.f32 1.0, %v415
    %v417 = vrcp.pop %v410
    %v418 = vmul.f32 1.0, %v417
    %v419 = vrcp.pop %v411
    %v420 = vmul.f32 1.0, %v419
    %v421 = vrcp.pop %v412
    %v422 = vmul.f32 1.0, %v421
    %v423 = vrcp.pop %v413
    %v424 = vmul.f32 1.0, %v423
    %v425 = vrcp.pop %v414
    %v426 = vmul.f32 1.0, %v425
    %v427 = vmul.f32 %v227, %v416
    %v428 = vmul.f32 %v229, %v418
    %v429 = vmul.f32 %v304, %v420
    %v430 = vmul.f32 %v233, %v422
    %v431 = vmul.f32 %v235, %v424
    %v432 = vmul.f32 %v310, %v426
    %v433 = vmul.f32 %v427, %v306
    %v434 = vmul.f32 %v428, %v381
    %v435 = vmul.f32 %v429, %v383
    %v436 = vmul.f32 %v430, %v312
    %v437 = vmul.f32 %v431, %v387
    %v438 = vmul.f32 %v432, %v389
    %v439 = vld [vmem:[#allocation8] sm:$0xff]
    %v440 = vld [vmem:[#allocation8 + $0x8] sm:$0xff]
    %v441 = vld [vmem:[#allocation7] sm:$0xff]
    %v442 = vld [vmem:[#allocation7 + $0x8] sm:$0xff]
    %v443 = vld [vmem:[#allocation7 + $0x10] sm:$0xff]
    %v444 = vld [vmem:[#allocation7 + $0x18] sm:$0xff]
    %v445 = vld [vmem:[#allocation7 + $0x20] sm:$0xff]
    %v446 = vld [vmem:[#allocation7 + $0x28] sm:$0xff]
    %v447 = vld [vmem:[#allocation7 + $0x30] sm:$0xff]
    %v448 = vld [vmem:[#allocation7 + $0x38] sm:$0xff]
    %v449 = vld [vmem:[#allocation7 + $0x40] sm:$0xff]
    %v450 = vld [vmem:[#allocation7 + $0x48] sm:$0xff]
    %v451 = vld [vmem:[#allocation7 + $0x50] sm:$0xff]
    %v452 = vld [vmem:[#allocation7 + $0x58] sm:$0xff]
    %v453 = vld [vmem:[#allocation7 + $0x60] sm:$0xff]
    %v454 = vld [vmem:[#allocation7 + $0x68] sm:$0xff]
    %v455 = vld [vmem:[#allocation7 + $0x70] sm:$0xff]
    %v456 = vld [vmem:[#allocation7 + $0x78] sm:$0xff]
    %v457 = vld [vmem:[#allocation7 + $0x80] sm:$0xff]
    %v458 = vld [vmem:[#allocation7 + $0x88] sm:$0xff]
    %v459 = vld [vmem:[#allocation7 + $0x90] sm:$0xff]
    %v460 = vld [vmem:[#allocation7 + $0x98] sm:$0xff]
    %v461 = vld [vmem:[#allocation7 + $0xa0] sm:$0xff]
    %v462 = vld [vmem:[#allocation7 + $0xa8] sm:$0xff]
    %v463 = vld [vmem:[#allocation7 + $0xb0] sm:$0xff]
    %v464 = vld [vmem:[#allocation7 + $0xb8] sm:$0xff]
    %v465 = vld [vmem:[#allocation7 + $0xc0] sm:$0xff]
    %v466 = vld [vmem:[#allocation7 + $0xc8] sm:$0xff]
    %v467 = vld [vmem:[#allocation7 + $0xd0] sm:$0xff]
    %v468 = vld [vmem:[#allocation7 + $0xd8] sm:$0xff]
    %v469 = vld [vmem:[#allocation7 + $0xe0] sm:$0xff]
    %v470 = vld [vmem:[#allocation7 + $0xe8] sm:$0xff]
    %v471 = vld [vmem:[#allocation7 + $0xf0] sm:$0xff]
    %v472 = vld [vmem:[#allocation7 + $0xf8] sm:$0xff]
    %v473 = vld [vmem:[#allocation7 + $0x100] sm:$0xff]
    %v474 = vld [vmem:[#allocation7 + $0x108] sm:$0xff]
    %v475 = vld [vmem:[#allocation7 + $0x110] sm:$0xff]
    %v476 = vld [vmem:[#allocation7 + $0x118] sm:$0xff]
    %v477 = vld [vmem:[#allocation7 + $0x120] sm:$0xff]
    %v478 = vld [vmem:[#allocation7 + $0x128] sm:$0xff]
    %v479 = vld [vmem:[#allocation7 + $0x130] sm:$0xff]
    %v480 = vld [vmem:[#allocation7 + $0x138] sm:$0xff]
    %v481 = vld [vmem:[#allocation7 + $0x140] sm:$0xff]
    %v482 = vld [vmem:[#allocation7 + $0x148] sm:$0xff]
    %v483 = vld [vmem:[#allocation7 + $0x150] sm:$0xff]
    %v484 = vld [vmem:[#allocation7 + $0x158] sm:$0xff]
    %v485 = vld [vmem:[#allocation7 + $0x160] sm:$0xff]
    %v486 = vld [vmem:[#allocation7 + $0x168] sm:$0xff]
    %v487 = vld [vmem:[#allocation7 + $0x170] sm:$0xff]
    %v488 = vld [vmem:[#allocation7 + $0x178] sm:$0xff]
    %489 = vmatprep.subr.mxu0 0.0
    %490 = vmatpush1.msra.mxu0 %v441
    %491 = vmatprep.subr.mxu0 0.0
    %492 = vmatpush1.msra.mxu0 %v442
    %493 = vmatprep.subr.mxu0 0.0
    %494 = vmatpush1.msra.mxu0 %v443
    %495 = vmatprep.subr.mxu0 0.0
    %496 = vmatpush1.msra.mxu0 %v444
    %497 = vmatprep.subr.mxu0 0.0
    %498 = vmatpush1.msra.mxu0 %v445
    %499 = vmatprep.subr.mxu0 0.0
    %500 = vmatpush1.msra.mxu0 %v446
    %501 = vmatprep.subr.mxu0 0.0
    %502 = vmatpush1.msra.mxu0 %v447
    %503 = vmatprep.subr.mxu0 0.0
    %504 = vmatpush1.msra.mxu0 %v448
    %505 = vmatprep.subr.mxu0 0.0
    %506 = vmatpush1.msra.mxu0 %v449
    %507 = vmatprep.subr.mxu0 0.0
    %508 = vmatpush1.msra.mxu0 %v450
    %509 = vmatprep.subr.mxu0 0.0
    %510 = vmatpush1.msra.mxu0 %v451
    %511 = vmatprep.subr.mxu0 0.0
    %512 = vmatpush1.msra.mxu0 %v452
    %513 = vmatprep.subr.mxu0 0.0
    %514 = vmatpush1.msra.mxu0 %v453
    %515 = vmatprep.subr.mxu0 0.0
    %516 = vmatpush1.msra.mxu0 %v454
    %517 = vmatprep.subr.mxu0 0.0
    %518 = vmatpush1.msra.mxu0 %v455
    %519 = vmatprep.subr.mxu0 0.0
    %520 = vmatpush1.msra.mxu0 %v456
    %521 = vmatprep.subr.mxu0 0.0
    %522 = vmatpush1.msra.mxu0 %v457
    %523 = vmatprep.subr.mxu0 0.0
    %524 = vmatpush1.msra.mxu0 %v458
    %525 = vmatprep.subr.mxu0 0.0
    %526 = vmatpush1.msra.mxu0 %v459
    %527 = vmatprep.subr.mxu0 0.0
    %528 = vmatpush1.msra.mxu0 %v460
    %529 = vmatprep.subr.mxu0 0.0
    %530 = vmatpush1.msra.mxu0 %v461
    %531 = vmatprep.subr.mxu0 0.0
    %532 = vmatpush1.msra.mxu0 %v462
    %533 = vmatprep.subr.mxu0 0.0
    %534 = vmatpush1.msra.mxu0 %v463
    %535 = vmatprep.subr.mxu0 0.0
    %536 = vmatpush1.msra.mxu0 %v464
    %537 = vmatprep.subr.mxu0 0.0
    %538 = vmatpush1.msra.mxu0 %v465
    %539 = vmatprep.subr.mxu0 0.0
    %540 = vmatpush1.msra.mxu0 %v466
    %541 = vmatprep.subr.mxu0 0.0
    %542 = vmatpush1.msra.mxu0 %v467
    %543 = vmatprep.subr.mxu0 0.0
    %544 = vmatpush1.msra.mxu0 %v468
    %545 = vmatprep.subr.mxu0 0.0
    %546 = vmatpush1.msra.mxu0 %v469
    %547 = vmatprep.subr.mxu0 0.0
    %548 = vmatpush1.msra.mxu0 %v470
    %549 = vmatprep.subr.mxu0 0.0
    %550 = vmatpush1.msra.mxu0 %v471
    %551 = vmatprep.subr.mxu0 0.0
    %552 = vmatpush1.msra.mxu0 %v472
    %553 = vmatprep.mubr.f32.mxu0 %v434
    %554 = vmatmul.mubr.f32.gmra.mrb[0].mxu0 %v433
    %v555 = vpop.f32.mrb[0].mxu0
    %v556 = vadd.f32 0.0, %v555
    %v557 = vpop.f32.mrb[0].mxu0
    %558 = vmatprep.mubr.f32.mxu0 %v437
    %559 = vmatmul.mubr.f32.gmra.mrb[0].mxu0 %v436
    %v560 = vpop.f32.mrb[0].mxu0
    %v561 = vadd.f32 0.0, %v560
    %v562 = vpop.f32.mrb[0].mxu0
    %563 = vdwg.mxu0
    %564 = vmatprep.subr.mxu0 0.0
    %565 = vmatpush1.msra.mxu0 %v473
    %566 = vmatprep.subr.mxu0 0.0
    %567 = vmatpush1.msra.mxu0 %v474
    %568 = vmatprep.subr.mxu0 0.0
    %569 = vmatpush1.msra.mxu0 %v475
    %570 = vmatprep.subr.mxu0 0.0
    %571 = vmatpush1.msra.mxu0 %v476
    %572 = vmatprep.subr.mxu0 0.0
    %573 = vmatpush1.msra.mxu0 %v477
    %574 = vmatprep.subr.mxu0 0.0
    %575 = vmatpush1.msra.mxu0 %v478
    %576 = vmatprep.subr.mxu0 0.0
    %577 = vmatpush1.msra.mxu0 %v479
    %578 = vmatprep.subr.mxu0 0.0
    %579 = vmatpush1.msra.mxu0 %v480
    %580 = vmatprep.subr.mxu0 0.0
    %581 = vmatpush1.msra.mxu0 %v481
    %582 = vmatprep.subr.mxu0 0.0
    %583 = vmatpush1.msra.mxu0 %v482
    %584 = vmatprep.subr.mxu0 0.0
    %585 = vmatpush1.msra.mxu0 %v483
    %586 = vmatprep.subr.mxu0 0.0
    %587 = vmatpush1.msra.mxu0 %v484
    %588 = vmatprep.subr.mxu0 0.0
    %589 = vmatpush1.msra.mxu0 %v485
    %590 = vmatprep.subr.mxu0 0.0
    %591 = vmatpush1.msra.mxu0 %v486
    %592 = vmatprep.subr.mxu0 0.0
    %593 = vmatpush1.msra.mxu0 %v487
    %594 = vmatprep.subr.mxu0 0.0
    %595 = vmatpush1.msra.mxu0 %v488
    %596 = vmatprep.subr.mxu0 0.0
    %597 = vmatpush1.msra.mxu0 0.0
    %598 = vmatprep.subr.mxu0 0.0
    %599 = vmatpush1.msra.mxu0 0.0
    %600 = vmatprep.subr.mxu0 0.0
    %601 = vmatpush1.msra.mxu0 0.0
    %602 = vmatprep.subr.mxu0 0.0
    %603 = vmatpush1.msra.mxu0 0.0
    %604 = vmatprep.subr.mxu0 0.0
    %605 = vmatpush1.msra.mxu0 0.0
    %606 = vmatprep.subr.mxu0 0.0
    %607 = vmatpush1.msra.mxu0 0.0
    %608 = vmatprep.subr.mxu0 0.0
    %609 = vmatpush1.msra.mxu0 0.0
    %610 = vmatprep.subr.mxu0 0.0
    %611 = vmatpush1.msra.mxu0 0.0
    %612 = vmatprep.subr.mxu0 0.0
    %613 = vmatpush1.msra.mxu0 0.0
    %614 = vmatprep.subr.mxu0 0.0
    %615 = vmatpush1.msra.mxu0 0.0
    %616 = vmatprep.subr.mxu0 0.0
    %617 = vmatpush1.msra.mxu0 0.0
    %618 = vmatprep.subr.mxu0 0.0
    %619 = vmatpush1.msra.mxu0 0.0
    %620 = vmatprep.subr.mxu0 0.0
    %621 = vmatpush1.msra.mxu0 0.0
    %622 = vmatprep.subr.mxu0 0.0
    %623 = vmatpush1.msra.mxu0 0.0
    %624 = vmatprep.subr.mxu0 0.0
    %625 = vmatpush1.msra.mxu0 0.0
    %626 = vmatprep.subr.mxu0 0.0
    %627 = vmatpush1.msra.mxu0 0.0
    %628 = vmatprep.mubr.f32.mxu0 0.0
    %629 = vmatmul.mubr.f32.gmra.mrb[0].mxu0 %v435
    %v630 = vpop.f32.mrb[0].mxu0
    %v631 = vadd.f32 %v556, %v630
    %v632 = vpop.f32.mrb[0].mxu0
    %633 = vmatprep.mubr.f32.mxu0 0.0
    %634 = vmatmul.mubr.f32.gmra.mrb[0].mxu0 %v438
    %v635 = vpop.f32.mrb[0].mxu0
    %v636 = vadd.f32 %v561, %v635
    %v637 = vpop.f32.mrb[0].mxu0
    %638 = vdwg.mxu0
    %v639 = vadd.f32 %v439, %v631
    %v640 = vadd.f32 %v440, %v636
    %641 = vst [vmem:[#allocation8] sm:$0xff] %v639
    %642 = vst [vmem:[#allocation8 + $0x8] sm:$0xff] %v640
    // Predicated region
    $region30: #{tpu_custom_call.1} parent=1 // pred_check
      _
    $region31: #{tpu_custom_call.1} parent=1 // pred_check_branch
      %644 = sbr.rel (0) target = $region33
    $region32: #{tpu_custom_call.1} parent=1 // pred_region
      %s646 = ssub.s32 256, 256
      %647 = vsyncadd [#allocation4], %s646
      %s648 = sshll.u32 [#allocation8], 4
      %s649 = int_to_ptr.vmem [resolvable:$true] %s648
      %654 = dma.vmem_to_hbm [thread:$0]  %s649, 256, %s3, [#allocation4], 128, 128, 8
    $region33: #{tpu_custom_call.1} parent=1 // pred_fallthru
      _
    // Predicated region
    $region34: #{tpu_custom_call.1} parent=1 // pred_check
      _
    $region35: #{tpu_custom_call.1} parent=1 // pred_check_branch
      %656 = sbr.rel (0) target = $region37
    $region36: #{tpu_custom_call.1} parent=1 // pred_region
      %657 = dma.done [#allocation4], 256
    $region37: #{tpu_custom_call.1} parent=1 // pred_fallthru
      _
    %658 = vsyncpa [#allocation3], 1
    %659 = vsyncpa [#allocation6], 1
    %660 = vsyncpa [#allocation4], 1

</llo_original>
